<compile_context>
chip_gen: v7x
topology: tpu7x:2x2x1
jax: 0.10.0
libtpu: 0.0.40
codegen_flags: <defaults>
</compile_context>

<pallas_src>
import functools

import jax
import jax.numpy as jnp
import numpy as np
from jax.experimental import pallas as pl
from jax.experimental.pallas import tpu as pltpu

LANE = 128
SUBLANE = 8
DEFAULT_BLOCK_B = 2048          # batch rows per grid step
VMEM_LIMIT_BYTES = 32 * 1024 * 1024

_COMPILER_PARAMS = pltpu.CompilerParams(
    dimension_semantics=("parallel",),
    vmem_limit_bytes=VMEM_LIMIT_BYTES,
)


def _round_up(v, m):
    return ((v + m - 1) // m) * m


# ----------------------------------------------------------------------------
# Kernel bodies
# ----------------------------------------------------------------------------
def _mlp_net(x, w_in_ref, b_in_ref, w_hid_ref, b_hid_ref, w_out_ref,
             b_out_ref, *, n_in, n_out, n_hl):
    """Tanh MLP on one (tb, n_in) batch tile; weights are VMEM-resident.

    First layer on the VPU (broadcast outer product, true K = n_in, usually 1);
    hidden/output layers on the MXU with low-precision operands and f32
    accumulation.  Zero padding of the hidden dim is exact: tanh(0)=0 and the
    padded weight rows/cols and biases are zero."""
    mxu_dtype = w_hid_ref.dtype
    # ---- input layer (VPU): (tb,1) * (1,h_pad) broadcast per input feature.
    pre = x[:, 0:1] * w_in_ref[0:1, :] + b_in_ref[...]
    for k in range(1, n_in):                       # static unroll, n_in tiny
        pre = pre + x[:, k:k + 1] * w_in_ref[k:k + 1, :]
    h = jnp.tanh(pre)
    # ---- hidden layers (MXU, bf16/f32 operands, f32 accumulate).
    for l in range(n_hl):                          # static unroll
        z = jnp.dot(h.astype(mxu_dtype), w_hid_ref[l],
                    preferred_element_type=jnp.float32) + b_hid_ref[l]
        h = jnp.tanh(z)
    # ---- output layer (MXU on lane-padded weight), then narrow slice + bias.
    out = jnp.dot(h.astype(mxu_dtype), w_out_ref[...],
                  preferred_element_type=jnp.float32)
    return out[:, :n_out] + b_out_ref[...]


def _sdof_kernel_scalar(gd_ref,                    # SMEM (1, 2): [G, D]
                        x_ref, w_in_ref, b_in_ref, w_hid_ref, b_hid_ref,
                        w_out_ref, b_out_ref, o_ref, *, n_in, n_out, n_hl):
    net = _mlp_net(x_ref[...], w_in_ref, b_in_ref, w_hid_ref, b_hid_ref,
                   w_out_ref, b_out_ref, n_in=n_in, n_out=n_out, n_hl=n_hl)
    o_ref[...] = gd_ref[0, 0] + gd_ref[0, 1] * net


def _sdof_kernel_tensor(x_ref, gd_ref,             # gd: (tb, 2*n_out) = [G|D]
                        w_in_ref, b_in_ref, w_hid_ref, b_hid_ref,
                        w_out_ref, b_out_ref, o_ref, *, n_in, n_out, n_hl):
    net = _mlp_net(x_ref[...], w_in_ref, b_in_ref, w_hid_ref, b_hid_ref,
                   w_out_ref, b_out_ref, n_in=n_in, n_out=n_out, n_hl=n_hl)
    gd = gd_ref[...]
    o_ref[...] = gd[:, :n_out] + gd[:, n_out:] * net


# ----------------------------------------------------------------------------
# pallas_call plumbing
# ----------------------------------------------------------------------------
def _batch_tiling(n, block_b):
    """Pick (row_tile, padded_rows); always >=2 grid steps so the 'parallel'
    batch axis can shard across v7x's two TensorCores (no cost on v5e/v6e)."""
    block_b = max(SUBLANE, _round_up(block_b, SUBLANE))
    if n <= block_b:
        tb = _round_up(max(pl.cdiv(max(n, 1), 2), 1), SUBLANE)
        return tb, 2 * tb
    return block_b, _round_up(n, block_b)


def _weight_specs(n_in, h_pad, out_pad, n_stack, n_out):
    # Full-array blocks + grid-invariant index_maps: weights stay resident in
    # VMEM across grid steps (pipeline skips re-DMA on unchanged blocks).
    # NOTE: pipeline_mode=pl.Buffered(1) would also drop the (negligible,
    # <0.5 MiB here) double-buffer copy of these resident operands; left at
    # the default buffering for lowering safety.
    return [
        pl.BlockSpec((n_in, h_pad), lambda i: (0, 0)),                # w_in f32
        pl.BlockSpec((1, h_pad), lambda i: (0, 0)),                   # b_in f32
        pl.BlockSpec((n_stack, h_pad, h_pad), lambda i: (0, 0, 0)),   # w_hid
        pl.BlockSpec((n_stack, 1, h_pad), lambda i: (0, 0, 0)),       # b_hid
        pl.BlockSpec((h_pad, out_pad), lambda i: (0, 0)),             # w_out
        pl.BlockSpec((1, n_out), lambda i: (0, 0)),                   # b_out
    ]


@functools.partial(jax.jit,
                   static_argnames=("n_in", "n_out", "n_hl", "block_b"))
def _forward_scalar(x, g, d, w_in, b_in, w_hid, b_hid, w_out, b_out,
                    *, n_in, n_out, n_hl, block_b):
    n = x.shape[0]
    h_pad = w_in.shape[1]
    out_pad = w_out.shape[1]
    tb, n_pad = _batch_tiling(n, block_b)

    x_p = jnp.pad(x.astype(jnp.float32), ((0, n_pad - n), (0, 0)))
    gd = jnp.stack([jnp.asarray(g, jnp.float32).reshape(()),
                    jnp.asarray(d, jnp.float32).reshape(())]).reshape(1, 2)

    kernel = functools.partial(_sdof_kernel_scalar,
                               n_in=n_in, n_out=n_out, n_hl=n_hl)
    y_pad = pl.pallas_call(
        kernel,
        out_shape=jax.ShapeDtypeStruct((n_pad, n_out), jnp.float32),
        grid=(n_pad // tb,),
        in_specs=[pl.BlockSpec(memory_space=pltpu.MemorySpace.SMEM),   # [G, D]
                  pl.BlockSpec((tb, n_in), lambda i: (i, 0))]          # x tile
                 + _weight_specs(n_in, h_pad, out_pad, w_hid.shape[0], n_out),
        out_specs=pl.BlockSpec((tb, n_out), lambda i: (i, 0)),
        compiler_params=_COMPILER_PARAMS,
    )(gd, x_p, w_in, b_in, w_hid, b_hid, w_out, b_out)
    return y_pad[:n]


@functools.partial(jax.jit,
                   static_argnames=("n_in", "n_out", "n_hl", "block_b"))
def _forward_tensor(x, g, d, w_in, b_in, w_hid, b_hid, w_out, b_out,
                    *, n_in, n_out, n_hl, block_b):
    n = x.shape[0]
    h_pad = w_in.shape[1]
    out_pad = w_out.shape[1]
    tb, n_pad = _batch_tiling(n, block_b)

    x_p = jnp.pad(x.astype(jnp.float32), ((0, n_pad - n), (0, 0)))
    g_b = jnp.broadcast_to(jnp.asarray(g, jnp.float32), (n, n_out))
    d_b = jnp.broadcast_to(jnp.asarray(d, jnp.float32), (n, n_out))
    gd = jnp.pad(jnp.concatenate([g_b, d_b], axis=1),      # (n_pad, 2*n_out)
                 ((0, n_pad - n), (0, 0)))

    kernel = functools.partial(_sdof_kernel_tensor,
                               n_in=n_in, n_out=n_out, n_hl=n_hl)
    y_pad = pl.pallas_call(
        kernel,
        out_shape=jax.ShapeDtypeStruct((n_pad, n_out), jnp.float32),
        grid=(n_pad // tb,),
        in_specs=[pl.BlockSpec((tb, n_in), lambda i: (i, 0)),          # x
                  pl.BlockSpec((tb, 2 * n_out), lambda i: (i, 0))]     # [G|D]
                 + _weight_specs(n_in, h_pad, out_pad, w_hid.shape[0], n_out),
        out_specs=pl.BlockSpec((tb, n_out), lambda i: (i, 0)),
        compiler_params=_COMPILER_PARAMS,
    )(x_p, gd, w_in, b_in, w_hid, b_hid, w_out, b_out)
    return y_pad[:n]


# ----------------------------------------------------------------------------
# Public API
# ----------------------------------------------------------------------------
def prepare_params(params, mxu_dtype=jnp.bfloat16):
    """One-time host-side padding + H2D upload of the network weights.

    Hidden/output matmul weights are stored in `mxu_dtype` (bf16 default: only
    the MXU sees them); input-layer weights and all biases stay f32."""
    w_in = np.asarray(params["w_in"], np.float32)      # (IN, H)
    b_in = np.asarray(params["b_in"], np.float32)      # (H,)
    w_hid = np.asarray(params["w_hid"], np.float32)    # (L-1, H, H)
    b_hid = np.asarray(params["b_hid"], np.float32)    # (L-1, H)
    w_out = np.asarray(params["w_out"], np.float32)    # (H, OUT)
    b_out = np.asarray(params["b_out"], np.float32)    # (OUT,)

    n_in, n_hid = w_in.shape
    n_out = w_out.shape[1]
    n_hl = w_hid.shape[0]

    h_pad = _round_up(n_hid, LANE)
    out_pad = _round_up(n_out, LANE)        # MXU lane width of output matmul
    n_stack = max(n_hl, 1)

    w_in_p = np.zeros((n_in, h_pad), np.float32)
    w_in_p[:, :n_hid] = w_in
    b_in_p = np.zeros((1, h_pad), np.float32)
    b_in_p[0, :n_hid] = b_in

    w_hid_p = np.zeros((n_stack, h_pad, h_pad), np.float32)
    b_hid_p = np.zeros((n_stack, 1, h_pad), np.float32)
    for l in range(n_hl):
        w_hid_p[l, :n_hid, :n_hid] = w_hid[l]
        b_hid_p[l, 0, :n_hid] = b_hid[l]

    w_out_p = np.zeros((h_pad, out_pad), np.float32)
    w_out_p[:n_hid, :n_out] = w_out
    b_out_p = b_out.reshape(1, n_out)

    prepared = dict(
        w_in=jnp.asarray(w_in_p),                       # f32 (VPU layer)
        b_in=jnp.asarray(b_in_p),
        w_hid=jnp.asarray(w_hid_p, dtype=mxu_dtype),    # MXU operand
        b_hid=jnp.asarray(b_hid_p),
        w_out=jnp.asarray(w_out_p, dtype=mxu_dtype),    # MXU operand
        b_out=jnp.asarray(b_out_p),
    )
    meta = dict(n_in=n_in, n_out=n_out, n_hl=n_hl)
    return prepared, meta


def sdof_pinn_forward(x, prepared, meta, G=0.0, D=1.0,
                      block_b=DEFAULT_BLOCK_B):
    """y = G + D * net(x).  `prepared`/`meta` come from prepare_params()."""
    x = jnp.asarray(x, jnp.float32)
    if x.ndim == 1:
        x = x[:, None]
    args = (prepared["w_in"], prepared["b_in"], prepared["w_hid"],
            prepared["b_hid"], prepared["w_out"], prepared["b_out"])
    kw = dict(n_in=meta["n_in"], n_out=meta["n_out"], n_hl=meta["n_hl"],
              block_b=block_b)
    if np.ndim(G) == 0 and np.ndim(D) == 0:
        return _forward_scalar(x, G, D, *args, **kw)
    return _forward_tensor(x, G, D, *args, **kw)


# ----------------------------------------------------------------------------
# Deterministic parameter init (matches nn.Linear shapes; synthetic values)
# ----------------------------------------------------------------------------
def init_params(key, n_input, n_output, n_hidden, n_layers):
    def linear_init(k, fan_in, fan_out):
        kw, kb = jax.random.split(k)
        bound = 1.0 / np.sqrt(fan_in)
        w = jax.random.uniform(kw, (fan_in, fan_out), jnp.float32, -bound, bound)
        b = jax.random.uniform(kb, (fan_out,), jnp.float32, -bound, bound)
        return np.asarray(w), np.asarray(b)

    keys = jax.random.split(key, n_layers + 1)
    w_in, b_in = linear_init(keys[0], n_input, n_hidden)
    w_hid = np.zeros((n_layers - 1, n_hidden, n_hidden), np.float32)
    b_hid = np.zeros((n_layers - 1, n_hidden), np.float32)
    for l in range(n_layers - 1):
        w_hid[l], b_hid[l] = linear_init(keys[1 + l], n_hidden, n_hidden)
    w_out, b_out = linear_init(keys[n_layers], n_hidden, n_output)
    return dict(w_in=w_in, b_in=b_in, w_hid=w_hid, b_hid=b_hid,
                w_out=w_out, b_out=b_out)


def _reference_forward(x, params, G, D):
    h = np.tanh(x @ params["w_in"] + params["b_in"])
    for l in range(params["w_hid"].shape[0]):
        h = np.tanh(h @ params["w_hid"][l] + params["b_hid"][l])
    net = h @ params["w_out"] + params["b_out"]
    return G + D * net


if __name__ == "__main__":
    # SDOF PINN: input = time (1 feature), output = state [x, xdot] (2 features)
    N_INPUT, N_OUTPUT, N_HIDDEN, N_LAYERS = 1, 2, 32, 4
    BATCH = 16

    key = jax.random.PRNGKey(0)
    kx, kp = jax.random.split(key)
    x = jax.random.uniform(kx, (BATCH, N_INPUT), jnp.float32, 0.0, 1.0)
    raw_params = init_params(kp, N_INPUT, N_OUTPUT, N_HIDDEN, N_LAYERS)

    x_np = np.asarray(x)
    y_ref = _reference_forward(x_np, raw_params, 0.0, 1.0)

    # production config: bf16 MXU operands (looser tolerance vs f32 reference)
    prep_bf16, meta = prepare_params(raw_params, mxu_dtype=jnp.bfloat16)
    y_bf16 = jax.block_until_ready(
        sdof_pinn_forward(x, prep_bf16, meta, G=0.0, D=1.0))
    np.testing.assert_allclose(np.asarray(y_bf16), y_ref, rtol=5e-2, atol=5e-2)

    # exact config: f32 MXU operands (tight tolerance)
    prep_f32, meta32 = prepare_params(raw_params, mxu_dtype=jnp.float32)
    y_f32 = jax.block_until_ready(
        sdof_pinn_forward(x, prep_f32, meta32, G=0.0, D=1.0))
    np.testing.assert_allclose(np.asarray(y_f32), y_ref, rtol=1e-5, atol=1e-5)

    # hard-BC style call: D is a (BATCH, 2) mask (tensor path), G stays scalar
    D_mask = np.concatenate(
        [np.zeros((1, N_OUTPUT), np.float32),
         np.ones((BATCH - 1, N_OUTPUT), np.float32)], axis=0)
    y_bc = jax.block_until_ready(
        sdof_pinn_forward(x, prep_f32, meta32, G=0.0, D=D_mask))
    np.testing.assert_allclose(
        np.asarray(y_bc),
        _reference_forward(x_np, raw_params, 0.0, D_mask),
        rtol=1e-5, atol=1e-5)

    print("KERNEL_OK")
</pallas_src>

<mosaic_0001>
module attributes {stable_mosaic.version = 11 : i64} {
  func.func @_sdof_kernel_scalar(%arg0: i32, %arg1: memref<1x2xf32, #tpu.memory_space<smem>>, %arg2: memref<8x1xf32, #tpu.memory_space<vmem>>, %arg3: memref<1x128xf32, #tpu.memory_space<vmem>>, %arg4: memref<1x128xf32, #tpu.memory_space<vmem>>, %arg5: memref<3x128x128xbf16, #tpu.memory_space<vmem>>, %arg6: memref<3x1x128xf32, #tpu.memory_space<vmem>>, %arg7: memref<128x128xbf16, #tpu.memory_space<vmem>>, %arg8: memref<1x2xf32, #tpu.memory_space<vmem>>, %arg9: memref<8x2xf32, #tpu.memory_space<vmem>>) attributes {dimension_semantics = [#tpu.dimension_semantics<parallel>], iteration_bounds = array<i64: 2>, scalar_prefetch = 0 : i64, scratch_operands = 0 : i64, tpu.core_type = #tpu.core_type<tc>, window_params = [{transform_indices = @transform_0, window_bounds = array<i64: 1, 2>}, {transform_indices = @transform_1, window_bounds = array<i64: 8, 1>}, {pipeline_mode = #tpu.pipeline_mode<synchronous>, transform_indices = @transform_2, window_bounds = array<i64: 1, 128>}, {pipeline_mode = #tpu.pipeline_mode<synchronous>, transform_indices = @transform_3, window_bounds = array<i64: 1, 128>}, {pipeline_mode = #tpu.pipeline_mode<synchronous>, transform_indices = @transform_4, window_bounds = array<i64: 3, 128, 128>}, {pipeline_mode = #tpu.pipeline_mode<synchronous>, transform_indices = @transform_5, window_bounds = array<i64: 3, 1, 128>}, {pipeline_mode = #tpu.pipeline_mode<synchronous>, transform_indices = @transform_6, window_bounds = array<i64: 128, 128>}, {pipeline_mode = #tpu.pipeline_mode<synchronous>, transform_indices = @transform_7, window_bounds = array<i64: 1, 2>}, {transform_indices = @transform_8, window_bounds = array<i64: 8, 2>}]} {
    %c0 = arith.constant 0 : index
    %c0_0 = arith.constant 0 : index
    %0 = vector.load %arg2[%c0, %c0_0] : memref<8x1xf32, #tpu.memory_space<vmem>>, vector<8x1xf32>
    %c0_1 = arith.constant 0 : index
    %c0_2 = arith.constant 0 : index
    %1 = vector.load %arg3[%c0_1, %c0_2] : memref<1x128xf32, #tpu.memory_space<vmem>>, vector<1x128xf32>
    %2 = vector.broadcast %0 : vector<8x1xf32> to vector<8x128xf32>
    %3 = vector.broadcast %1 : vector<1x128xf32> to vector<8x128xf32>
    %4 = arith.mulf %2, %3 : vector<8x128xf32>
    %c0_3 = arith.constant 0 : index
    %c0_4 = arith.constant 0 : index
    %5 = vector.load %arg4[%c0_3, %c0_4] : memref<1x128xf32, #tpu.memory_space<vmem>>, vector<1x128xf32>
    %6 = vector.broadcast %5 : vector<1x128xf32> to vector<8x128xf32>
    %7 = arith.addf %4, %6 : vector<8x128xf32>
    %8 = math.tanh %7 : vector<8x128xf32>
    %9 = arith.truncf %8 : vector<8x128xf32> to vector<8x128xbf16>
    %c0_5 = arith.constant 0 : index
    %c0_6 = arith.constant 0 : index
    %c0_7 = arith.constant 0 : index
    %10 = vector.load %arg5[%c0_5, %c0_6, %c0_7] : memref<3x128x128xbf16, #tpu.memory_space<vmem>>, vector<1x128x128xbf16>
    %11 = vector.shape_cast %10 : vector<1x128x128xbf16> to vector<128x128xbf16>
    %cst = arith.constant dense<0.000000e+00> : vector<8x128xf32>
    %12 = tpu.matmul %9, %11, %cst {dimension_numbers = #tpu.dot_dimension_numbers<[1], [0], [0], [1], [0, 0, 1, 1], [], []>} : vector<8x128xbf16>, vector<128x128xbf16>, vector<8x128xf32> -> vector<8x128xf32>
    %c0_8 = arith.constant 0 : index
    %c0_9 = arith.constant 0 : index
    %c0_10 = arith.constant 0 : index
    %13 = vector.load %arg6[%c0_8, %c0_9, %c0_10] : memref<3x1x128xf32, #tpu.memory_space<vmem>>, vector<1x1x128xf32>
    %14 = vector.shape_cast %13 : vector<1x1x128xf32> to vector<1x128xf32>
    %15 = vector.broadcast %14 : vector<1x128xf32> to vector<8x128xf32>
    %16 = arith.addf %12, %15 : vector<8x128xf32>
    %17 = math.tanh %16 : vector<8x128xf32>
    %18 = arith.truncf %17 : vector<8x128xf32> to vector<8x128xbf16>
    %c1 = arith.constant 1 : index
    %c0_11 = arith.constant 0 : index
    %c0_12 = arith.constant 0 : index
    %19 = vector.load %arg5[%c1, %c0_11, %c0_12] : memref<3x128x128xbf16, #tpu.memory_space<vmem>>, vector<1x128x128xbf16>
    %20 = vector.shape_cast %19 : vector<1x128x128xbf16> to vector<128x128xbf16>
    %cst_13 = arith.constant dense<0.000000e+00> : vector<8x128xf32>
    %21 = tpu.matmul %18, %20, %cst_13 {dimension_numbers = #tpu.dot_dimension_numbers<[1], [0], [0], [1], [0, 0, 1, 1], [], []>} : vector<8x128xbf16>, vector<128x128xbf16>, vector<8x128xf32> -> vector<8x128xf32>
    %c1_14 = arith.constant 1 : index
    %c0_15 = arith.constant 0 : index
    %c0_16 = arith.constant 0 : index
    %22 = vector.load %arg6[%c1_14, %c0_15, %c0_16] : memref<3x1x128xf32, #tpu.memory_space<vmem>>, vector<1x1x128xf32>
    %23 = vector.shape_cast %22 : vector<1x1x128xf32> to vector<1x128xf32>
    %24 = vector.broadcast %23 : vector<1x128xf32> to vector<8x128xf32>
    %25 = arith.addf %21, %24 : vector<8x128xf32>
    %26 = math.tanh %25 : vector<8x128xf32>
    %27 = arith.truncf %26 : vector<8x128xf32> to vector<8x128xbf16>
    %c2 = arith.constant 2 : index
    %c0_17 = arith.constant 0 : index
    %c0_18 = arith.constant 0 : index
    %28 = vector.load %arg5[%c2, %c0_17, %c0_18] : memref<3x128x128xbf16, #tpu.memory_space<vmem>>, vector<1x128x128xbf16>
    %29 = vector.shape_cast %28 : vector<1x128x128xbf16> to vector<128x128xbf16>
    %cst_19 = arith.constant dense<0.000000e+00> : vector<8x128xf32>
    %30 = tpu.matmul %27, %29, %cst_19 {dimension_numbers = #tpu.dot_dimension_numbers<[1], [0], [0], [1], [0, 0, 1, 1], [], []>} : vector<8x128xbf16>, vector<128x128xbf16>, vector<8x128xf32> -> vector<8x128xf32>
    %c2_20 = arith.constant 2 : index
    %c0_21 = arith.constant 0 : index
    %c0_22 = arith.constant 0 : index
    %31 = vector.load %arg6[%c2_20, %c0_21, %c0_22] : memref<3x1x128xf32, #tpu.memory_space<vmem>>, vector<1x1x128xf32>
    %32 = vector.shape_cast %31 : vector<1x1x128xf32> to vector<1x128xf32>
    %33 = vector.broadcast %32 : vector<1x128xf32> to vector<8x128xf32>
    %34 = arith.addf %30, %33 : vector<8x128xf32>
    %35 = math.tanh %34 : vector<8x128xf32>
    %36 = arith.truncf %35 : vector<8x128xf32> to vector<8x128xbf16>
    %c0_23 = arith.constant 0 : index
    %c0_24 = arith.constant 0 : index
    %37 = vector.load %arg7[%c0_23, %c0_24] : memref<128x128xbf16, #tpu.memory_space<vmem>>, vector<128x128xbf16>
    %cst_25 = arith.constant dense<0.000000e+00> : vector<8x128xf32>
    %38 = tpu.matmul %36, %37, %cst_25 {dimension_numbers = #tpu.dot_dimension_numbers<[1], [0], [0], [1], [0, 0, 1, 1], [], []>} : vector<8x128xbf16>, vector<128x128xbf16>, vector<8x128xf32> -> vector<8x128xf32>
    %39 = vector.extract_strided_slice %38 {offsets = [0, 0], sizes = [8, 2], strides = [1, 1]} : vector<8x128xf32> to vector<8x2xf32>
    %c0_26 = arith.constant 0 : index
    %c0_27 = arith.constant 0 : index
    %40 = vector.load %arg8[%c0_26, %c0_27] : memref<1x2xf32, #tpu.memory_space<vmem>>, vector<1x2xf32>
    %41 = vector.broadcast %40 : vector<1x2xf32> to vector<8x2xf32>
    %42 = arith.addf %39, %41 : vector<8x2xf32>
    %c0_28 = arith.constant 0 : index
    %c0_29 = arith.constant 0 : index
    %43 = memref.load %arg1[%c0_28, %c0_29] : memref<1x2xf32, #tpu.memory_space<smem>>
    %c0_30 = arith.constant 0 : index
    %c1_31 = arith.constant 1 : index
    %44 = memref.load %arg1[%c0_30, %c1_31] : memref<1x2xf32, #tpu.memory_space<smem>>
    %45 = vector.broadcast %44 : f32 to vector<8x2xf32>
    %46 = arith.mulf %45, %42 : vector<8x2xf32>
    %47 = vector.broadcast %43 : f32 to vector<8x2xf32>
    %48 = arith.addf %47, %46 : vector<8x2xf32>
    %c0_32 = arith.constant 0 : index
    %c0_33 = arith.constant 0 : index
    %49 = vector.load %arg9[%c0_32, %c0_33] : memref<8x2xf32, #tpu.memory_space<vmem>>, vector<8x2xf32>
    tpu.vector_store %arg9[%c0_32, %c0_33], %48 {strides = array<i32>} : memref<8x2xf32, #tpu.memory_space<vmem>>, vector<8x2xf32>,
    return
  }
  func.func @transform_0(%arg0: i32) -> (i32, i32) {
    %c0_i32 = arith.constant 0 : i32
    %c0_i32_0 = arith.constant 0 : i32
    %c0_i32_1 = arith.constant 0 : i32
    return %c0_i32, %c0_i32_0 : i32, i32
  }
  func.func @transform_1(%arg0: i32) -> (i32, i32) {
    %c0_i32 = arith.constant 0 : i32
    %c0_i32_0 = arith.constant 0 : i32
    return %arg0, %c0_i32 : i32, i32
  }
  func.func @transform_2(%arg0: i32) -> (i32, i32) {
    %c0_i32 = arith.constant 0 : i32
    %c0_i32_0 = arith.constant 0 : i32
    %c0_i32_1 = arith.constant 0 : i32
    return %c0_i32, %c0_i32_0 : i32, i32
  }
  func.func @transform_3(%arg0: i32) -> (i32, i32) {
    %c0_i32 = arith.constant 0 : i32
    %c0_i32_0 = arith.constant 0 : i32
    %c0_i32_1 = arith.constant 0 : i32
    return %c0_i32, %c0_i32_0 : i32, i32
  }
  func.func @transform_4(%arg0: i32) -> (i32, i32, i32) {
    %c0_i32 = arith.constant 0 : i32
    %c0_i32_0 = arith.constant 0 : i32
    %c0_i32_1 = arith.constant 0 : i32
    %c0_i32_2 = arith.constant 0 : i32
    return %c0_i32, %c0_i32_0, %c0_i32_1 : i32, i32, i32
  }
  func.func @transform_5(%arg0: i32) -> (i32, i32, i32) {
    %c0_i32 = arith.constant 0 : i32
    %c0_i32_0 = arith.constant 0 : i32
    %c0_i32_1 = arith.constant 0 : i32
    %c0_i32_2 = arith.constant 0 : i32
    return %c0_i32, %c0_i32_0, %c0_i32_1 : i32, i32, i32
  }
  func.func @transform_6(%arg0: i32) -> (i32, i32) {
    %c0_i32 = arith.constant 0 : i32
    %c0_i32_0 = arith.constant 0 : i32
    %c0_i32_1 = arith.constant 0 : i32
    return %c0_i32, %c0_i32_0 : i32, i32
  }
  func.func @transform_7(%arg0: i32) -> (i32, i32) {
    %c0_i32 = arith.constant 0 : i32
    %c0_i32_0 = arith.constant 0 : i32
    %c0_i32_1 = arith.constant 0 : i32
    return %c0_i32, %c0_i32_0 : i32, i32
  }
  func.func @transform_8(%arg0: i32) -> (i32, i32) {
    %c0_i32 = arith.constant 0 : i32
    %c0_i32_0 = arith.constant 0 : i32
    return %arg0, %c0_i32 : i32, i32
  }
}

</mosaic_0001>

<llo_original>
// kernel: _forward_scalar.1
$region0: #{_forward_scalar.1}
  #allocation0 [shape = 'u32[]', space=smem, size = 0x4, offset = 0x4, fixed_abs, tag = 'smem constant byte address 0x4 - core index']
  #allocation1 [shape = 'u32[144,128]{1,0:T(1,128)}', space=vmem, size = 0x12000, scoped, tag = 'internal scratch']
  %s0 = inlined_call_operand.vmem [shape: f32[1,2], index: 0, kind: input, shape index: {}]
  %s1 = inlined_call_operand.vmem [shape: f32[16,1], index: 1, kind: input, shape index: {}]
  %s2 = inlined_call_operand.vmem [shape: f32[1,128], index: 2, kind: input, shape index: {}]
  %s3 = inlined_call_operand.vmem [shape: f32[1,128], index: 3, kind: input, shape index: {}]
  %s4 = inlined_call_operand.hbm [shape: bf16[3,128,128], index: 4, kind: input, shape index: {}]
  %s5 = inlined_call_operand.vmem [shape: f32[3,1,128], index: 5, kind: input, shape index: {}]
  %s6 = inlined_call_operand.hbm [shape: bf16[128,128], index: 6, kind: input, shape index: {}]
  %s7 = inlined_call_operand.vmem [shape: f32[1,2], index: 7, kind: input, shape index: {}]
  %s8 = inlined_call_operand.vmem [shape: f32[16,2], index: 8, kind: output, shape index: {}]
  %s9 = sld [smem:[#allocation0]]
  $region77: #{_forward_scalar.1} parent=0
    _
  %s11 = ssub.s32 1, %s9
  %s12 = scalar_select 0, %s11, %s9
  $region1: #{_forward_scalar.1} parent=0
    #allocation2 [shape = 'u8[512]{0}', space=smem, size = 0x200, scoped, tag = 'input window, operand 0, single buffered']
    #allocation3 [shape = 's32[2]{0}', space=sflag, size = 0x8, scoped, tag = 'scoped memory for _forward_scalar.1']
    #allocation4 [shape = 's32[2]{0}', space=sflag, size = 0x8, scoped, tag = 'scoped memory for _forward_scalar.1']
    #allocation5 [shape = 'u8[98304]{0}', space=vmem, size = 0x18000, scoped, tag = 'input window, operand 4, single buffered']
    #allocation6 [shape = 'u8[32768]{0}', space=vmem, size = 0x8000, scoped, tag = 'input window, operand 6, single buffered']
    #allocation7 [shape = 's32[1]{0}', space=sflag, size = 0x4, scoped, tag = 'scoped memory for _forward_scalar.1']
    %13 = vsyncpa [#allocation4], 0
    %14 = vsyncpa [#allocation3], 0
    %15 = vsyncpa [#allocation7], 0
    loop: start=0, step=1, limit=4
    $region2: #{_forward_scalar.1} parent=1 // loop_pre_header
      _
    $region3: #{_forward_scalar.1} parent=1 // loop_header
      %s17 = sphi 0, %s21
      %p18 = scmp.ge.s32.totalorder %s17, 4
      %s25 = sphi 0, %s25
      %s27 = sphi 0, %s25
      %s28 = sphi 0, %s27
      %s42 = sphi 0, %s28
      %s48 = sphi 0, %s50
      %s51 = sphi 0, %s48
      %s52 = sphi 0, %s51
      %s68 = sphi 0, %s52
      %s72 = sphi 0, %s72
      %s74 = sphi 0, %s72
      %s75 = sphi 0, %s74
      %s89 = sphi 0, %s75
      %s93 = sphi 0, %s93
      %s95 = sphi 0, %s93
      %s96 = sphi 0, %s95
      %s110 = sphi 0, %s96
      %s114 = sphi 0, %s114
      %s116 = sphi 0, %s114
      %s117 = sphi 0, %s116
      %s131 = sphi 0, %s117
      %s135 = sphi 0, %s135
      %s137 = sphi 0, %s135
      %s138 = sphi 0, %s137
      %s152 = sphi 0, %s138
      %s156 = sphi 0, %s156
      %s158 = sphi 0, %s156
      %s159 = sphi 0, %s158
      %s173 = sphi 0, %s159
      %s177 = sphi 0, %s177
      %s179 = sphi 0, %s177
      %s180 = sphi 0, %s179
      %s194 = sphi 0, %s180
      %s200 = sphi 0, %s202
      %s203 = sphi 0, %s200
      %s204 = sphi 0, %s203
      %s220 = sphi 0, %s204
    $region4: #{_forward_scalar.1} parent=1 // loop_header_branch
      %20 = sbr.rel (%p18) target = $region8
    $region5: #{_forward_scalar.1} parent=1 // loop_body
      %s22 = ssub.s32 %s17, 1
      %s23 = ssub.s32 %s17, 2
      %s24 = sadd.s32 %s17, 1
      %s26 = sadd.s32 %s25, 1
      %p29 = scmp.eq.s32.totalorder %s17, 1
      %p30 = scmp.ne.s32.totalorder %s25, %s27
      %p31 = scmp.eq.s32.totalorder %s17, 0
      %p32 = por %p30, %p31
      %p33 = scmp.ne.s32.totalorder %s25, %s27
      %p34 = scmp.eq.s32.totalorder %s22, 1
      %p35 = por %p33, %p34
      %p36 = scmp.ne.s32.totalorder %s27, %s28
      %p37 = scmp.eq.s32.totalorder %s22, 0
      %p38 = por %p36, %p37
      %p39 = scmp.ne.s32.totalorder %s27, %s28
      %p40 = scmp.eq.s32.totalorder %s23, 1
      %p41 = por %p39, %p40
      %p43 = scmp.ne.s32.totalorder %s28, %s42
      %p44 = scmp.eq.s32.totalorder %s23, 0
      %p45 = por %p43, %p44
      %s46 = ssub.s32 %s17, %s24
      %p47 = scmp.eq.s32.totalorder %s46, 0
      %s49 = sadd.s32 %s48, 1
      %s50 = scalar_select %p47, %s48, %s49
      %p53 = pneg %p47
      %p54 = scmp.eq.s32.totalorder %s17, 1
      %p55 = por %p53, %p54
      %p56 = scmp.ne.s32.totalorder %s48, %s51
      %p57 = scmp.eq.s32.totalorder %s17, 0
      %p58 = por %p56, %p57
      %p59 = scmp.ne.s32.totalorder %s48, %s51
      %p60 = scmp.eq.s32.totalorder %s22, 1
      %p61 = por %p59, %p60
      %p62 = scmp.ne.s32.totalorder %s51, %s52
      %p63 = scmp.eq.s32.totalorder %s22, 0
      %p64 = por %p62, %p63
      %p65 = scmp.ne.s32.totalorder %s51, %s52
      %p66 = scmp.eq.s32.totalorder %s23, 1
      %p67 = por %p65, %p66
      %p69 = scmp.ne.s32.totalorder %s52, %s68
      %p70 = scmp.eq.s32.totalorder %s23, 0
      %p71 = por %p69, %p70
      %s73 = sadd.s32 %s72, 1
      %p76 = scmp.eq.s32.totalorder %s17, 1
      %p77 = scmp.ne.s32.totalorder %s72, %s74
      %p78 = scmp.eq.s32.totalorder %s17, 0
      %p79 = por %p77, %p78
      %p80 = scmp.ne.s32.totalorder %s72, %s74
      %p81 = scmp.eq.s32.totalorder %s22, 1
      %p82 = por %p80, %p81
      %p83 = scmp.ne.s32.totalorder %s74, %s75
      %p84 = scmp.eq.s32.totalorder %s22, 0
      %p85 = por %p83, %p84
      %p86 = scmp.ne.s32.totalorder %s74, %s75
      %p87 = scmp.eq.s32.totalorder %s23, 1
      %p88 = por %p86, %p87
      %p90 = scmp.ne.s32.totalorder %s75, %s89
      %p91 = scmp.eq.s32.totalorder %s23, 0
      %p92 = por %p90, %p91
      %s94 = sadd.s32 %s93, 1
      %p97 = scmp.eq.s32.totalorder %s17, 1
      %p98 = scmp.ne.s32.totalorder %s93, %s95
      %p99 = scmp.eq.s32.totalorder %s17, 0
      %p100 = por %p98, %p99
      %p101 = scmp.ne.s32.totalorder %s93, %s95
      %p102 = scmp.eq.s32.totalorder %s22, 1
      %p103 = por %p101, %p102
      %p104 = scmp.ne.s32.totalorder %s95, %s96
      %p105 = scmp.eq.s32.totalorder %s22, 0
      %p106 = por %p104, %p105
      %p107 = scmp.ne.s32.totalorder %s95, %s96
      %p108 = scmp.eq.s32.totalorder %s23, 1
      %p109 = por %p107, %p108
      %p111 = scmp.ne.s32.totalorder %s96, %s110
      %p112 = scmp.eq.s32.totalorder %s23, 0
      %p113 = por %p111, %p112
      %s115 = sadd.s32 %s114, 1
      %p118 = scmp.eq.s32.totalorder %s17, 1
      %p119 = scmp.ne.s32.totalorder %s114, %s116
      %p120 = scmp.eq.s32.totalorder %s17, 0
      %p121 = por %p119, %p120
      %p122 = scmp.ne.s32.totalorder %s114, %s116
      %p123 = scmp.eq.s32.totalorder %s22, 1
      %p124 = por %p122, %p123
      %p125 = scmp.ne.s32.totalorder %s116, %s117
      %p126 = scmp.eq.s32.totalorder %s22, 0
      %p127 = por %p125, %p126
      %p128 = scmp.ne.s32.totalorder %s116, %s117
      %p129 = scmp.eq.s32.totalorder %s23, 1
      %p130 = por %p128, %p129
      %p132 = scmp.ne.s32.totalorder %s117, %s131
      %p133 = scmp.eq.s32.totalorder %s23, 0
      %p134 = por %p132, %p133
      %s136 = sadd.s32 %s135, 1
      %p139 = scmp.eq.s32.totalorder %s17, 1
      %p140 = scmp.ne.s32.totalorder %s135, %s137
      %p141 = scmp.eq.s32.totalorder %s17, 0
      %p142 = por %p140, %p141
      %p143 = scmp.ne.s32.totalorder %s135, %s137
      %p144 = scmp.eq.s32.totalorder %s22, 1
      %p145 = por %p143, %p144
      %p146 = scmp.ne.s32.totalorder %s137, %s138
      %p147 = scmp.eq.s32.totalorder %s22, 0
      %p148 = por %p146, %p147
      %p149 = scmp.ne.s32.totalorder %s137, %s138
      %p150 = scmp.eq.s32.totalorder %s23, 1
      %p151 = por %p149, %p150
      %p153 = scmp.ne.s32.totalorder %s138, %s152
      %p154 = scmp.eq.s32.totalorder %s23, 0
      %p155 = por %p153, %p154
      %s157 = sadd.s32 %s156, 1
      %p160 = scmp.eq.s32.totalorder %s17, 1
      %p161 = scmp.ne.s32.totalorder %s156, %s158
      %p162 = scmp.eq.s32.totalorder %s17, 0
      %p163 = por %p161, %p162
      %p164 = scmp.ne.s32.totalorder %s156, %s158
      %p165 = scmp.eq.s32.totalorder %s22, 1
      %p166 = por %p164, %p165
      %p167 = scmp.ne.s32.totalorder %s158, %s159
      %p168 = scmp.eq.s32.totalorder %s22, 0
      %p169 = por %p167, %p168
      %p170 = scmp.ne.s32.totalorder %s158, %s159
      %p171 = scmp.eq.s32.totalorder %s23, 1
      %p172 = por %p170, %p171
      %p174 = scmp.ne.s32.totalorder %s159, %s173
      %p175 = scmp.eq.s32.totalorder %s23, 0
      %p176 = por %p174, %p175
      %s178 = sadd.s32 %s177, 1
      %p181 = scmp.eq.s32.totalorder %s17, 1
      %p182 = scmp.ne.s32.totalorder %s177, %s179
      %p183 = scmp.eq.s32.totalorder %s17, 0
      %p184 = por %p182, %p183
      %p185 = scmp.ne.s32.totalorder %s177, %s179
      %p186 = scmp.eq.s32.totalorder %s22, 1
      %p187 = por %p185, %p186
      %p188 = scmp.ne.s32.totalorder %s179, %s180
      %p189 = scmp.eq.s32.totalorder %s22, 0
      %p190 = por %p188, %p189
      %p191 = scmp.ne.s32.totalorder %s179, %s180
      %p192 = scmp.eq.s32.totalorder %s23, 1
      %p193 = por %p191, %p192
      %p195 = scmp.ne.s32.totalorder %s180, %s194
      %p196 = scmp.eq.s32.totalorder %s23, 0
      %p197 = por %p195, %p196
      %s198 = ssub.s32 %s17, %s24
      %p199 = scmp.eq.s32.totalorder %s198, 0
      %s201 = sadd.s32 %s200, 1
      %s202 = scalar_select %p199, %s200, %s201
      %p205 = pneg %p199
      %p206 = scmp.eq.s32.totalorder %s17, 1
      %p207 = por %p205, %p206
      %p208 = scmp.ne.s32.totalorder %s200, %s203
      %p209 = scmp.eq.s32.totalorder %s17, 0
      %p210 = por %p208, %p209
      %p211 = scmp.ne.s32.totalorder %s200, %s203
      %p212 = scmp.eq.s32.totalorder %s22, 1
      %p213 = por %p211, %p212
      %p214 = scmp.ne.s32.totalorder %s203, %s204
      %p215 = scmp.eq.s32.totalorder %s22, 0
      %p216 = por %p214, %p215
      %p217 = scmp.ne.s32.totalorder %s203, %s204
      %p218 = scmp.eq.s32.totalorder %s23, 1
      %p219 = por %p217, %p218
      %p221 = scmp.ne.s32.totalorder %s204, %s220
      %p222 = scmp.eq.s32.totalorder %s23, 0
      %p223 = por %p221, %p222
      %p224 = scmp.le.s32.totalorder 1, %s17
      %p225 = scmp.lt.s32.totalorder %s17, 3
      %p226 = pnand %p224, %p225
      %p227 = pneg %p226
      // Predicated region
      $region9: #{_forward_scalar.1} parent=5 // pred_check
        _
      $region10: #{_forward_scalar.1} parent=5 // pred_check_branch
        %229 = sbr.rel (%p226) target = $region12
      $region11: #{_forward_scalar.1} parent=5 // pred_region
        %s230 = ssub.s32 %s17, 1
        // Predicated region
        $region13: #{_forward_scalar.1} parent=11 // pred_check
          %p231 = pneg %p38
        $region14: #{_forward_scalar.1} parent=11 // pred_check_branch
          %233 = sbr.rel (%p231) target = $region16
        $region15: #{_forward_scalar.1} parent=11 // pred_region
          %s235 = ssub.s32 16, 16
          %236 = vsyncadd [#allocation4], %s235
          %s238 = sshll.u32 %s0, 4
          %s239 = int_to_ptr.vmem [resolvable:$true] %s238
          %241 = dma.vmem_to_smem %s239, 16, [#allocation2], [#allocation4]
        $region16: #{_forward_scalar.1} parent=11 // pred_fallthru
          _
        // Predicated region
        $region17: #{_forward_scalar.1} parent=11 // pred_check
          %p242 = pneg %p85
        $region18: #{_forward_scalar.1} parent=11 // pred_check_branch
          %244 = sbr.rel (%p242) target = $region20
        $region19: #{_forward_scalar.1} parent=11 // pred_region
          _
        $region20: #{_forward_scalar.1} parent=11 // pred_fallthru
          _
        // Predicated region
        $region21: #{_forward_scalar.1} parent=11 // pred_check
          %p245 = pneg %p106
        $region22: #{_forward_scalar.1} parent=11 // pred_check_branch
          %247 = sbr.rel (%p245) target = $region24
        $region23: #{_forward_scalar.1} parent=11 // pred_region
          _
        $region24: #{_forward_scalar.1} parent=11 // pred_fallthru
          _
        // Predicated region
        $region25: #{_forward_scalar.1} parent=11 // pred_check
          %p248 = pneg %p127
        $region26: #{_forward_scalar.1} parent=11 // pred_check_branch
          %250 = sbr.rel (%p248) target = $region28
        $region27: #{_forward_scalar.1} parent=11 // pred_region
          %s252 = ssub.s32 3072, 3072
          %253 = vsyncadd [#allocation3], %s252
          %s254 = sshll.u32 [#allocation5], 4
          %s255 = int_to_ptr.vmem [resolvable:$true] %s254
          %260 = dma.hbm_to_vmem [thread:$0]  %s4, 3072, %s255, [#allocation3], 64, 64, 4
        $region28: #{_forward_scalar.1} parent=11 // pred_fallthru
          _
        // Predicated region
        $region29: #{_forward_scalar.1} parent=11 // pred_check
          %p261 = pneg %p148
        $region30: #{_forward_scalar.1} parent=11 // pred_check_branch
          %263 = sbr.rel (%p261) target = $region32
        $region31: #{_forward_scalar.1} parent=11 // pred_region
          _
        $region32: #{_forward_scalar.1} parent=11 // pred_fallthru
          _
        // Predicated region
        $region33: #{_forward_scalar.1} parent=11 // pred_check
          %p264 = pneg %p169
        $region34: #{_forward_scalar.1} parent=11 // pred_check_branch
          %266 = sbr.rel (%p264) target = $region36
        $region35: #{_forward_scalar.1} parent=11 // pred_region
          %s268 = ssub.s32 1024, 1024
          %269 = vsyncadd [#allocation7], %s268
          %s270 = sshll.u32 [#allocation6], 4
          %s271 = int_to_ptr.vmem [resolvable:$true] %s270
          %276 = dma.hbm_to_vmem [thread:$0]  %s6, 1024, %s271, [#allocation7], 64, 64, 4
        $region36: #{_forward_scalar.1} parent=11 // pred_fallthru
          _
        // Predicated region
        $region37: #{_forward_scalar.1} parent=11 // pred_check
          %p277 = pneg %p190
        $region38: #{_forward_scalar.1} parent=11 // pred_check_branch
          %279 = sbr.rel (%p277) target = $region40
        $region39: #{_forward_scalar.1} parent=11 // pred_region
          _
        $region40: #{_forward_scalar.1} parent=11 // pred_fallthru
          _
      $region12: #{_forward_scalar.1} parent=5 // pred_fallthru
        _
      %p280 = scmp.lt.s32.totalorder %s17, 2
      // Predicated region
      $region41: #{_forward_scalar.1} parent=5 // pred_check
        %p281 = pneg %p280
      $region42: #{_forward_scalar.1} parent=5 // pred_check_branch
        %283 = sbr.rel (%p281) target = $region44
      $region43: #{_forward_scalar.1} parent=5 // pred_region
        // Predicated region
        $region45: #{_forward_scalar.1} parent=43 // pred_check
          %p284 = pneg %p58
        $region46: #{_forward_scalar.1} parent=43 // pred_check_branch
          %286 = sbr.rel (%p284) target = $region48
        $region47: #{_forward_scalar.1} parent=43 // pred_region
          %p287 = scmp.lt.s32.totalorder %s17, 1
          %s288 = scalar_select %p287, %s17, 1
          %s289 = smul.addr %s288, 8
          %s290 = scalar_lea.vmem %s1, %s289
        $region48: #{_forward_scalar.1} parent=43 // pred_fallthru
          _
      $region44: #{_forward_scalar.1} parent=5 // pred_fallthru
        _
      %p291 = scmp.le.s32.totalorder 1, %s17
      %p292 = scmp.lt.s32.totalorder %s17, 3
      %p293 = pnand %p291, %p292
      %p294 = pneg %p293
      // Predicated region
      $region49: #{_forward_scalar.1} parent=5 // pred_check
        _
      $region50: #{_forward_scalar.1} parent=5 // pred_check_branch
        %296 = sbr.rel (%p293) target = $region52
      $region51: #{_forward_scalar.1} parent=5 // pred_region
        %s297 = ssub.s32 %s17, 1
        // Predicated region
        $region53: #{_forward_scalar.1} parent=51 // pred_check
          %p298 = pneg %p38
        $region54: #{_forward_scalar.1} parent=51 // pred_check_branch
          %300 = sbr.rel (%p298) target = $region56
        $region55: #{_forward_scalar.1} parent=51 // pred_region
          %301 = dma.done [#allocation4], 16
        $region56: #{_forward_scalar.1} parent=51 // pred_fallthru
          _
        // Predicated region
        $region57: #{_forward_scalar.1} parent=51 // pred_check
          %p302 = pneg %p127
        $region58: #{_forward_scalar.1} parent=51 // pred_check_branch
          %304 = sbr.rel (%p302) target = $region60
        $region59: #{_forward_scalar.1} parent=51 // pred_region
          %305 = dma.done [#allocation3], 3072
        $region60: #{_forward_scalar.1} parent=51 // pred_fallthru
          _
        // Predicated region
        $region61: #{_forward_scalar.1} parent=51 // pred_check
          %p306 = pneg %p169
        $region62: #{_forward_scalar.1} parent=51 // pred_check_branch
          %308 = sbr.rel (%p306) target = $region64
        $region63: #{_forward_scalar.1} parent=51 // pred_region
          %309 = dma.done [#allocation7], 1024
        $region64: #{_forward_scalar.1} parent=51 // pred_fallthru
          _
        %310 = sfence
        %p311 = pneg %p38
        %p312 = pneg %p35
        %p313 = scmp.lt.s32.totalorder %s22, 1
        %s314 = scalar_select %p313, %s22, 1
        %s315 = smul.addr %s314, 8
        %s316 = scalar_lea.vmem %s1, %s315
        %p317 = pneg %p64
        %p318 = pneg %p61
        %p319 = pneg %p85
        %p320 = pneg %p82
        %p321 = pneg %p106
        %p322 = pneg %p103
        %p323 = pneg %p127
        %p324 = pneg %p124
        %p325 = pneg %p148
        %p326 = pneg %p145
        %p327 = pneg %p169
        %p328 = pneg %p166
        %p329 = pneg %p190
        %p330 = pneg %p187
        %p331 = pneg %p216
        %p332 = pneg %p213
        %p333 = scmp.lt.s32.totalorder %s22, 1
        %s334 = scalar_select %p333, %s22, 1
        %s335 = smul.addr %s334, 8
        %s336 = scalar_lea.vmem %s8, %s335
        %p337 = scmp.lt.s32.totalorder %s22, 1
        %s338 = scalar_select %p337, %s22, 1
        %s339 = smul.addr %s338, 8
        %s340 = scalar_lea.vmem %s1, %s339
        %p341 = scmp.lt.s32.totalorder %s22, 1
        %s342 = scalar_select %p341, %s22, 1
        %s343 = smul.addr %s342, 8
        %s344 = scalar_lea.vmem %s8, %s343
        %v346 = vld [vmem:[%s340] sm:$0xff]
        %v347 = vld [vmem:[%s2] sm:$0x1]
        %349 = vset.pattern.permute.xlu0 0
        %350 = vperm.xlu0 %349, %v346
        %v351 = vpop.permute.xlu0 %350
        %v354 = vlaneseq
        %v355 = vshrl.u32 %v354, 7
        %v356 = vsub.s32 0, %v355
        %v357 = vrot.slane %v347, %v356
        %v359 = vmul.f32 %v351, %v357
        %v360 = vld [vmem:[%s3] sm:$0x1]
        %v362 = vlaneseq
        %v363 = vshrl.u32 %v362, 7
        %v364 = vsub.s32 0, %v363
        %v365 = vrot.slane %v360, %v364
        %v367 = vadd.f32 %v359, %v365
        %v368 = vtanh.pop %v367
        %v369 = vpack.c.bf16 %v368, %v368
        %v370 = vld [vmem:[#allocation5] sm:$0xf]
        %v371 = vld [vmem:[#allocation5 + $0x4] sm:$0xf]
        %v372 = vld [vmem:[#allocation5 + $0x8] sm:$0xf]
        %v373 = vld [vmem:[#allocation5 + $0xc] sm:$0xf]
        %v374 = vld [vmem:[#allocation5 + $0x10] sm:$0xf]
        %v375 = vld [vmem:[#allocation5 + $0x14] sm:$0xf]
        %v376 = vld [vmem:[#allocation5 + $0x18] sm:$0xf]
        %v377 = vld [vmem:[#allocation5 + $0x1c] sm:$0xf]
        %v378 = vld [vmem:[#allocation5 + $0x20] sm:$0xf]
        %v379 = vld [vmem:[#allocation5 + $0x24] sm:$0xf]
        %v380 = vld [vmem:[#allocation5 + $0x28] sm:$0xf]
        %v381 = vld [vmem:[#allocation5 + $0x2c] sm:$0xf]
        %v382 = vld [vmem:[#allocation5 + $0x30] sm:$0xf]
        %v383 = vld [vmem:[#allocation5 + $0x34] sm:$0xf]
        %v384 = vld [vmem:[#allocation5 + $0x38] sm:$0xf]
        %v385 = vld [vmem:[#allocation5 + $0x3c] sm:$0xf]
        %v386 = vld [vmem:[%s5] sm:$0x1]
        %v388 = vlaneseq
        %v389 = vshrl.u32 %v388, 7
        %v390 = vsub.s32 0, %v389
        %v391 = vrot.slane %v386, %v390
        %v409 = vunpack.c.l.b16 %v370
        %v410 = vunpack.c.l.b16 %v371
        %v411 = vunpack.c.l.b16 %v372
        %v412 = vunpack.c.l.b16 %v373
        %v413 = vunpack.c.l.b16 %v374
        %v414 = vunpack.c.l.b16 %v375
        %v415 = vunpack.c.l.b16 %v376
        %v416 = vunpack.c.l.b16 %v377
        %v417 = vunpack.c.l.b16 %v378
        %v418 = vunpack.c.l.b16 %v379
        %v419 = vunpack.c.l.b16 %v380
        %v420 = vunpack.c.l.b16 %v381
        %v421 = vunpack.c.l.b16 %v382
        %v422 = vunpack.c.l.b16 %v383
        %v423 = vunpack.c.l.b16 %v384
        %v424 = vunpack.c.l.b16 %v385
        %v425 = vpack.c.b16 %v410, %v409
        %v426 = vpack.c.b16 %v412, %v411
        %v427 = vpack.c.b16 %v414, %v413
        %v428 = vpack.c.b16 %v416, %v415
        %v429 = vpack.c.b16 %v418, %v417
        %v430 = vpack.c.b16 %v420, %v419
        %v431 = vpack.c.b16 %v422, %v421
        %v432 = vpack.c.b16 %v424, %v423
        %441 = vmatprep.subr.bf16.mxu0 0
        %442 = vmatpush1.bf16.msra.mxu0 %v425
        %443 = vmatprep.subr.bf16.mxu0 0
        %444 = vmatpush1.bf16.msra.mxu0 %v426
        %445 = vmatprep.subr.bf16.mxu0 0
        %446 = vmatpush1.bf16.msra.mxu0 %v427
        %447 = vmatprep.subr.bf16.mxu0 0
        %448 = vmatpush1.bf16.msra.mxu0 %v428
        %449 = vmatprep.subr.bf16.mxu0 0
        %450 = vmatpush1.bf16.msra.mxu0 %v429
        %451 = vmatprep.subr.bf16.mxu0 0
        %452 = vmatpush1.bf16.msra.mxu0 %v430
        %453 = vmatprep.subr.bf16.mxu0 0
        %454 = vmatpush1.bf16.msra.mxu0 %v431
        %455 = vmatprep.subr.bf16.mxu0 0
        %456 = vmatpush1.bf16.msra.mxu0 %v432
        %457 = vmatprep.subr.bf16.mxu0 0
        %458 = vmatpush1.bf16.msra.mxu0 0
        %459 = vmatprep.subr.bf16.mxu0 0
        %460 = vmatpush1.bf16.msra.mxu0 0
        %461 = vmatprep.subr.bf16.mxu0 0
        %462 = vmatpush1.bf16.msra.mxu0 0
        %463 = vmatprep.subr.bf16.mxu0 0
        %464 = vmatpush1.bf16.msra.mxu0 0
        %465 = vmatprep.subr.bf16.mxu0 0
        %466 = vmatpush1.bf16.msra.mxu0 0
        %467 = vmatprep.subr.bf16.mxu0 0
        %468 = vmatpush1.bf16.msra.mxu0 0
        %469 = vmatprep.subr.bf16.mxu0 0
        %470 = vmatpush1.bf16.msra.mxu0 0
        %471 = vmatprep.subr.bf16.mxu0 0
        %472 = vmatpush1.bf16.msra.mxu0 0
        %473 = vmatprep.mubr.bf16.mxu0 0
        %474 = vmatmul.mubr.bf16.gmra.mrb[0].mxu0 %v369
        %v475 = vpop.f32.mrb[0].mxu0
        %v476 = vadd.f32 %v391, %v475
        %v477 = vpop.f32.mrb[0].mxu0
        %v478 = vpop.f32.mrb[0].mxu0
        %v479 = vpop.f32.mrb[0].mxu0
        %480 = vdwg.mxu0
        %v481 = vtanh.pop %v476
        %v482 = vpack.c.bf16 %v481, %v481
        %s483 = scalar_lea.vmem [#allocation5], 64
        %v484 = vld [vmem:[%s483] sm:$0xf]
        %v485 = vld [vmem:[%s483 + $0x4] sm:$0xf]
        %v486 = vld [vmem:[%s483 + $0x8] sm:$0xf]
        %v487 = vld [vmem:[%s483 + $0xc] sm:$0xf]
        %v488 = vld [vmem:[%s483 + $0x10] sm:$0xf]
        %v489 = vld [vmem:[%s483 + $0x14] sm:$0xf]
        %v490 = vld [vmem:[%s483 + $0x18] sm:$0xf]
        %v491 = vld [vmem:[%s483 + $0x1c] sm:$0xf]
        %v492 = vld [vmem:[%s483 + $0x20] sm:$0xf]
        %v493 = vld [vmem:[%s483 + $0x24] sm:$0xf]
        %v494 = vld [vmem:[%s483 + $0x28] sm:$0xf]
        %v495 = vld [vmem:[%s483 + $0x2c] sm:$0xf]
        %v496 = vld [vmem:[%s483 + $0x30] sm:$0xf]
        %v497 = vld [vmem:[%s483 + $0x34] sm:$0xf]
        %v498 = vld [vmem:[%s483 + $0x38] sm:$0xf]
        %v499 = vld [vmem:[%s483 + $0x3c] sm:$0xf]
        %s500 = scalar_lea.vmem %s5, 1
        %v501 = vld [vmem:[%s500] sm:$0x1]
        %v503 = vlaneseq
        %v504 = vshrl.u32 %v503, 7
        %v505 = vsub.s32 0, %v504
        %v506 = vrot.slane %v501, %v505
        %v524 = vunpack.c.l.b16 %v484
        %v525 = vunpack.c.l.b16 %v485
        %v526 = vunpack.c.l.b16 %v486
        %v527 = vunpack.c.l.b16 %v487
        %v528 = vunpack.c.l.b16 %v488
        %v529 = vunpack.c.l.b16 %v489
        %v530 = vunpack.c.l.b16 %v490
        %v531 = vunpack.c.l.b16 %v491
        %v532 = vunpack.c.l.b16 %v492
        %v533 = vunpack.c.l.b16 %v493
        %v534 = vunpack.c.l.b16 %v494
        %v535 = vunpack.c.l.b16 %v495
        %v536 = vunpack.c.l.b16 %v496
        %v537 = vunpack.c.l.b16 %v497
        %v538 = vunpack.c.l.b16 %v498
        %v539 = vunpack.c.l.b16 %v499
        %v540 = vpack.c.b16 %v525, %v524
        %v541 = vpack.c.b16 %v527, %v526
        %v542 = vpack.c.b16 %v529, %v528
        %v543 = vpack.c.b16 %v531, %v530
        %v544 = vpack.c.b16 %v533, %v532
        %v545 = vpack.c.b16 %v535, %v534
        %v546 = vpack.c.b16 %v537, %v536
        %v547 = vpack.c.b16 %v539, %v538
        %556 = vmatprep.subr.bf16.mxu0 0
        %557 = vmatpush1.bf16.msra.mxu0 %v540
        %558 = vmatprep.subr.bf16.mxu0 0
        %559 = vmatpush1.bf16.msra.mxu0 %v541
        %560 = vmatprep.subr.bf16.mxu0 0
        %561 = vmatpush1.bf16.msra.mxu0 %v542
        %562 = vmatprep.subr.bf16.mxu0 0
        %563 = vmatpush1.bf16.msra.mxu0 %v543
        %564 = vmatprep.subr.bf16.mxu0 0
        %565 = vmatpush1.bf16.msra.mxu0 %v544
        %566 = vmatprep.subr.bf16.mxu0 0
        %567 = vmatpush1.bf16.msra.mxu0 %v545
        %568 = vmatprep.subr.bf16.mxu0 0
        %569 = vmatpush1.bf16.msra.mxu0 %v546
        %570 = vmatprep.subr.bf16.mxu0 0
        %571 = vmatpush1.bf16.msra.mxu0 %v547
        %572 = vmatprep.subr.bf16.mxu0 0
        %573 = vmatpush1.bf16.msra.mxu0 0
        %574 = vmatprep.subr.bf16.mxu0 0
        %575 = vmatpush1.bf16.msra.mxu0 0
        %576 = vmatprep.subr.bf16.mxu0 0
        %577 = vmatpush1.bf16.msra.mxu0 0
        %578 = vmatprep.subr.bf16.mxu0 0
        %579 = vmatpush1.bf16.msra.mxu0 0
        %580 = vmatprep.subr.bf16.mxu0 0
        %581 = vmatpush1.bf16.msra.mxu0 0
        %582 = vmatprep.subr.bf16.mxu0 0
        %583 = vmatpush1.bf16.msra.mxu0 0
        %584 = vmatprep.subr.bf16.mxu0 0
        %585 = vmatpush1.bf16.msra.mxu0 0
        %586 = vmatprep.subr.bf16.mxu0 0
        %587 = vmatpush1.bf16.msra.mxu0 0
        %588 = vmatprep.mubr.bf16.mxu0 0
        %589 = vmatmul.mubr.bf16.gmra.mrb[0].mxu0 %v482
        %v590 = vpop.f32.mrb[0].mxu0
        %v591 = vadd.f32 %v506, %v590
        %v592 = vpop.f32.mrb[0].mxu0
        %v593 = vpop.f32.mrb[0].mxu0
        %v594 = vpop.f32.mrb[0].mxu0
        %595 = vdwg.mxu0
        %v596 = vtanh.pop %v591
        %v597 = vpack.c.bf16 %v596, %v596
        %s598 = scalar_lea.vmem [#allocation5], 128
        %v599 = vld [vmem:[%s598] sm:$0xf]
        %v600 = vld [vmem:[%s598 + $0x4] sm:$0xf]
        %v601 = vld [vmem:[%s598 + $0x8] sm:$0xf]
        %v602 = vld [vmem:[%s598 + $0xc] sm:$0xf]
        %v603 = vld [vmem:[%s598 + $0x10] sm:$0xf]
        %v604 = vld [vmem:[%s598 + $0x14] sm:$0xf]
        %v605 = vld [vmem:[%s598 + $0x18] sm:$0xf]
        %v606 = vld [vmem:[%s598 + $0x1c] sm:$0xf]
        %v607 = vld [vmem:[%s598 + $0x20] sm:$0xf]
        %v608 = vld [vmem:[%s598 + $0x24] sm:$0xf]
        %v609 = vld [vmem:[%s598 + $0x28] sm:$0xf]
        %v610 = vld [vmem:[%s598 + $0x2c] sm:$0xf]
        %v611 = vld [vmem:[%s598 + $0x30] sm:$0xf]
        %v612 = vld [vmem:[%s598 + $0x34] sm:$0xf]
        %v613 = vld [vmem:[%s598 + $0x38] sm:$0xf]
        %v614 = vld [vmem:[%s598 + $0x3c] sm:$0xf]
        %s615 = scalar_lea.vmem %s5, 2
        %v616 = vld [vmem:[%s615] sm:$0x1]
        %v618 = vlaneseq
        %v619 = vshrl.u32 %v618, 7
        %v620 = vsub.s32 0, %v619
        %v621 = vrot.slane %v616, %v620
        %v639 = vunpack.c.l.b16 %v599
        %v640 = vunpack.c.l.b16 %v600
        %v641 = vunpack.c.l.b16 %v601
        %v642 = vunpack.c.l.b16 %v602
        %v643 = vunpack.c.l.b16 %v603
        %v644 = vunpack.c.l.b16 %v604
        %v645 = vunpack.c.l.b16 %v605
        %v646 = vunpack.c.l.b16 %v606
        %v647 = vunpack.c.l.b16 %v607
        %v648 = vunpack.c.l.b16 %v608
        %v649 = vunpack.c.l.b16 %v609
        %v650 = vunpack.c.l.b16 %v610
        %v651 = vunpack.c.l.b16 %v611
        %v652 = vunpack.c.l.b16 %v612
        %v653 = vunpack.c.l.b16 %v613
        %v654 = vunpack.c.l.b16 %v614
        %v655 = vpack.c.b16 %v640, %v639
        %v656 = vpack.c.b16 %v642, %v641
        %v657 = vpack.c.b16 %v644, %v643
        %v658 = vpack.c.b16 %v646, %v645
        %v659 = vpack.c.b16 %v648, %v647
        %v660 = vpack.c.b16 %v650, %v649
        %v661 = vpack.c.b16 %v652, %v651
        %v662 = vpack.c.b16 %v654, %v653
        %671 = vmatprep.subr.bf16.mxu0 0
        %672 = vmatpush1.bf16.msra.mxu0 %v655
        %673 = vmatprep.subr.bf16.mxu0 0
        %674 = vmatpush1.bf16.msra.mxu0 %v656
        %675 = vmatprep.subr.bf16.mxu0 0
        %676 = vmatpush1.bf16.msra.mxu0 %v657
        %677 = vmatprep.subr.bf16.mxu0 0
        %678 = vmatpush1.bf16.msra.mxu0 %v658
        %679 = vmatprep.subr.bf16.mxu0 0
        %680 = vmatpush1.bf16.msra.mxu0 %v659
        %681 = vmatprep.subr.bf16.mxu0 0
        %682 = vmatpush1.bf16.msra.mxu0 %v660
        %683 = vmatprep.subr.bf16.mxu0 0
        %684 = vmatpush1.bf16.msra.mxu0 %v661
        %685 = vmatprep.subr.bf16.mxu0 0
        %686 = vmatpush1.bf16.msra.mxu0 %v662
        %687 = vmatprep.subr.bf16.mxu0 0
        %688 = vmatpush1.bf16.msra.mxu0 0
        %689 = vmatprep.subr.bf16.mxu0 0
        %690 = vmatpush1.bf16.msra.mxu0 0
        %691 = vmatprep.subr.bf16.mxu0 0
        %692 = vmatpush1.bf16.msra.mxu0 0
        %693 = vmatprep.subr.bf16.mxu0 0
        %694 = vmatpush1.bf16.msra.mxu0 0
        %695 = vmatprep.subr.bf16.mxu0 0
        %696 = vmatpush1.bf16.msra.mxu0 0
        %697 = vmatprep.subr.bf16.mxu0 0
        %698 = vmatpush1.bf16.msra.mxu0 0
        %699 = vmatprep.subr.bf16.mxu0 0
        %700 = vmatpush1.bf16.msra.mxu0 0
        %701 = vmatprep.subr.bf16.mxu0 0
        %702 = vmatpush1.bf16.msra.mxu0 0
        %703 = vmatprep.mubr.bf16.mxu0 0
        %704 = vmatmul.mubr.bf16.gmra.mrb[0].mxu0 %v597
        %v705 = vpop.f32.mrb[0].mxu0
        %v706 = vadd.f32 %v621, %v705
        %v707 = vpop.f32.mrb[0].mxu0
        %v708 = vpop.f32.mrb[0].mxu0
        %v709 = vpop.f32.mrb[0].mxu0
        %710 = vdwg.mxu0
        %v711 = vtanh.pop %v706
        %v712 = vpack.c.bf16 %v711, %v711
        %v713 = vld [vmem:[#allocation6] sm:$0xf]
        %v714 = vld [vmem:[#allocation6 + $0x4] sm:$0xf]
        %v715 = vld [vmem:[#allocation6 + $0x8] sm:$0xf]
        %v716 = vld [vmem:[#allocation6 + $0xc] sm:$0xf]
        %v717 = vld [vmem:[#allocation6 + $0x10] sm:$0xf]
        %v718 = vld [vmem:[#allocation6 + $0x14] sm:$0xf]
        %v719 = vld [vmem:[#allocation6 + $0x18] sm:$0xf]
        %v720 = vld [vmem:[#allocation6 + $0x1c] sm:$0xf]
        %v721 = vld [vmem:[#allocation6 + $0x20] sm:$0xf]
        %v722 = vld [vmem:[#allocation6 + $0x24] sm:$0xf]
        %v723 = vld [vmem:[#allocation6 + $0x28] sm:$0xf]
        %v724 = vld [vmem:[#allocation6 + $0x2c] sm:$0xf]
        %v725 = vld [vmem:[#allocation6 + $0x30] sm:$0xf]
        %v726 = vld [vmem:[#allocation6 + $0x34] sm:$0xf]
        %v727 = vld [vmem:[#allocation6 + $0x38] sm:$0xf]
        %v728 = vld [vmem:[#allocation6 + $0x3c] sm:$0xf]
        %v745 = vunpack.c.l.b16 %v713
        %v746 = vunpack.c.l.b16 %v714
        %v747 = vunpack.c.l.b16 %v715
        %v748 = vunpack.c.l.b16 %v716
        %v749 = vunpack.c.l.b16 %v717
        %v750 = vunpack.c.l.b16 %v718
        %v751 = vunpack.c.l.b16 %v719
        %v752 = vunpack.c.l.b16 %v720
        %v753 = vunpack.c.l.b16 %v721
        %v754 = vunpack.c.l.b16 %v722
        %v755 = vunpack.c.l.b16 %v723
        %v756 = vunpack.c.l.b16 %v724
        %v757 = vunpack.c.l.b16 %v725
        %v758 = vunpack.c.l.b16 %v726
        %v759 = vunpack.c.l.b16 %v727
        %v760 = vunpack.c.l.b16 %v728
        %v761 = vpack.c.b16 %v746, %v745
        %v762 = vpack.c.b16 %v748, %v747
        %v763 = vpack.c.b16 %v750, %v749
        %v764 = vpack.c.b16 %v752, %v751
        %v765 = vpack.c.b16 %v754, %v753
        %v766 = vpack.c.b16 %v756, %v755
        %v767 = vpack.c.b16 %v758, %v757
        %v768 = vpack.c.b16 %v760, %v759
        %777 = vmatprep.subr.bf16.mxu0 0
        %778 = vmatpush1.bf16.msra.mxu0 %v761
        %779 = vmatprep.subr.bf16.mxu0 0
        %780 = vmatpush1.bf16.msra.mxu0 %v762
        %781 = vmatprep.subr.bf16.mxu0 0
        %782 = vmatpush1.bf16.msra.mxu0 %v763
        %783 = vmatprep.subr.bf16.mxu0 0
        %784 = vmatpush1.bf16.msra.mxu0 %v764
        %785 = vmatprep.subr.bf16.mxu0 0
        %786 = vmatpush1.bf16.msra.mxu0 %v765
        %787 = vmatprep.subr.bf16.mxu0 0
        %788 = vmatpush1.bf16.msra.mxu0 %v766
        %789 = vmatprep.subr.bf16.mxu0 0
        %790 = vmatpush1.bf16.msra.mxu0 %v767
        %791 = vmatprep.subr.bf16.mxu0 0
        %792 = vmatpush1.bf16.msra.mxu0 %v768
        %793 = vmatprep.subr.bf16.mxu0 0
        %794 = vmatpush1.bf16.msra.mxu0 0
        %795 = vmatprep.subr.bf16.mxu0 0
        %796 = vmatpush1.bf16.msra.mxu0 0
        %797 = vmatprep.subr.bf16.mxu0 0
        %798 = vmatpush1.bf16.msra.mxu0 0
        %799 = vmatprep.subr.bf16.mxu0 0
        %800 = vmatpush1.bf16.msra.mxu0 0
        %801 = vmatprep.subr.bf16.mxu0 0
        %802 = vmatpush1.bf16.msra.mxu0 0
        %803 = vmatprep.subr.bf16.mxu0 0
        %804 = vmatpush1.bf16.msra.mxu0 0
        %805 = vmatprep.subr.bf16.mxu0 0
        %806 = vmatpush1.bf16.msra.mxu0 0
        %807 = vmatprep.subr.bf16.mxu0 0
        %808 = vmatpush1.bf16.msra.mxu0 0
        %809 = vmatprep.mubr.bf16.mxu0 0
        %810 = vmatmul.mubr.bf16.gmra.mrb[0].mxu0 %v712
        %v811 = vpop.f32.mrb[0].mxu0
        %v812 = vadd.f32 0.0, %v811
        %v813 = vpop.f32.mrb[0].mxu0
        %v814 = vpop.f32.mrb[0].mxu0
        %v815 = vpop.f32.mrb[0].mxu0
        %816 = vdwg.mxu0
        %v817 = vld [vmem:[%s7] sm:$0x1]
        %v819 = vlaneseq
        %v820 = vshrl.u32 %v819, 7
        %v821 = vsub.s32 0, %v820
        %v822 = vrot.slane %v817, %v821
        %v824 = vadd.f32 %v812, %v822
        %s825 = sld [smem:[#allocation2]]
        %s826 = sld [smem:[#allocation2 + $0x1]]
        %v827 = vstv %s826
        %v828 = vmul.f32 %v827, %v824
        %v829 = vstv %s825
        %v830 = vadd.f32 %v829, %v828
        %vm831 = vcmask 15360
        %832 = vst.msk [vmem:[%s344] sm:$0xff] %vm831, %v830
        %p833 = scmp.lt.s32.totalorder %s22, 1
        %s834 = scalar_select %p833, %s22, 1
        %s835 = smul.addr %s834, 8
        %s836 = scalar_lea.vmem %s8, %s835
        // Predicated region
        $region65: #{_forward_scalar.1} parent=51 // pred_check
          %p837 = pneg %p213
        $region66: #{_forward_scalar.1} parent=51 // pred_check_branch
          %839 = sbr.rel (%p837) target = $region68
        $region67: #{_forward_scalar.1} parent=51 // pred_region
          _
        $region68: #{_forward_scalar.1} parent=51 // pred_fallthru
          _
      $region52: #{_forward_scalar.1} parent=5 // pred_fallthru
        _
      %p840 = scmp.le.s32.totalorder 2, %s17
      // Predicated region
      $region69: #{_forward_scalar.1} parent=5 // pred_check
        %p841 = pneg %p840
      $region70: #{_forward_scalar.1} parent=5 // pred_check_branch
        %843 = sbr.rel (%p841) target = $region72
      $region71: #{_forward_scalar.1} parent=5 // pred_region
        %s844 = ssub.s32 %s17, 2
        // Predicated region
        $region73: #{_forward_scalar.1} parent=71 // pred_check
          %p845 = pneg %p219
        $region74: #{_forward_scalar.1} parent=71 // pred_check_branch
          %847 = sbr.rel (%p845) target = $region76
        $region75: #{_forward_scalar.1} parent=71 // pred_region
          %p848 = scmp.lt.s32.totalorder %s23, 1
          %s849 = scalar_select %p848, %s23, 1
          %s850 = smul.addr %s849, 8
          %s851 = scalar_lea.vmem %s8, %s850
        $region76: #{_forward_scalar.1} parent=71 // pred_fallthru
          _
      $region72: #{_forward_scalar.1} parent=5 // pred_fallthru
        _
    $region6: #{_forward_scalar.1} parent=1 // loop_footer
      %s21 = sadd.s32 1, %s17
    $region7: #{_forward_scalar.1} parent=1 // loop_footer_branch
      %16 = sbr.rel target = $region3
    $region8: #{_forward_scalar.1} parent=1 // loop_exit
      _
    %852 = vsyncpa [#allocation3], 1
    %s853 = scalar_lea.sflag [#allocation3], 1
    %854 = vsyncpa %s853, 1
    %855 = vsyncpa [#allocation7], 1
    %856 = vsyncpa [#allocation4], 1
    %s857 = scalar_lea.sflag [#allocation4], 1
    %858 = vsyncpa %s857, 1

</llo_original>
